<compile_context>
chip_gen: v7x
topology: tpu7x:2x2x1
jax: 0.10.0
libtpu: 0.0.40
codegen_flags: <defaults>
</compile_context>

<pallas_src>
import functools

import jax
import jax.numpy as jnp
from jax.experimental import pallas as pl
from jax.experimental.pallas import tpu as pltpu


LANES = 128
SUBLANES = 8
CHUNK = SUBLANES * LANES       # 1024 elements = one f32 vreg
TILE_ROWS_MAX = 8192           # (8192, 128) f32 block = 4 MiB per input
UNROLL = 8                     # inner fori_loop unroll factor


@functools.lru_cache(maxsize=None)
def _num_tensorcores() -> int:
    """TensorCores per chip (2 on v7x, 1 on v5e/v6e). Conservative default 1."""
    try:
        info = pltpu.get_tpu_info()
        for attr in ("num_cores", "core_count", "tensor_cores_per_chip",
                     "tensorcores_per_chip", "num_tensorcores"):
            v = getattr(info, attr, None)
            if isinstance(v, int) and v >= 1:
                return v
    except Exception:
        pass
    return 1


def _depth_loss_kernel(steps, num_blocks, last_chunks,
                       p_ref, l_ref, sum_ref, sumsq_ref):
    pi = pl.program_id(0)      # partial index ("parallel" -> one per TensorCore)
    si = pl.program_id(1)      # reduction step within this partial ("arbitrary")

    # Output blocks have a constant block index along the reduction axis, so
    # they are VMEM-resident accumulators: init at the first step.
    @pl.when(si == 0)
    def _():
        sum_ref[...] = jnp.zeros_like(sum_ref)
        sumsq_ref[...] = jnp.zeros_like(sumsq_ref)

    block_idx = pi * steps + si                 # unclamped logical block id
    full_chunks = p_ref.shape[0] // SUBLANES    # static python int

    def accumulate(n_chunks):
        # Touch each (8,128) chunk exactly once: compute d, fold into two
        # vreg accumulators.  No full-tile d / d*d temporaries, no extra
        # VMEM stores/loads.
        def body(c, carry):
            acc, accsq = carry
            r = pl.multiple_of(c * SUBLANES, SUBLANES)
            x = p_ref[pl.ds(r, SUBLANES), :].astype(jnp.float32)
            y = l_ref[pl.ds(r, SUBLANES), :].astype(jnp.float32)
            # Two EUP log pushes + one VPU sub; cheaper than a f32 divide
            # (vrcp + Newton-Raphson) followed by one log.
            d = jnp.log(x) - jnp.log(y)
            return acc + d, accsq + d * d

        zero = jnp.zeros((SUBLANES, LANES), jnp.float32)
        acc, accsq = jax.lax.fori_loop(
            0, n_chunks, body, (zero, zero),
            unroll=max(1, min(UNROLL, n_chunks)))
        sum_ref[...] += acc
        sumsq_ref[...] += accsq

    if last_chunks == full_chunks:
        # Rows divide evenly into tiles: single uniform path.  The scalar gate
        # only skips the clamped over-covered duplicate block (odd num_blocks
        # split across partials) — no per-element mask anywhere.
        @pl.when(block_idx < num_blocks)
        def _():
            accumulate(full_chunks)
    else:
        @pl.when(block_idx < num_blocks - 1)
        def _():
            accumulate(full_chunks)

        # Ragged last tile: the valid region is a whole number of (8,128)
        # chunks (rows and tile_rows are both multiples of 8), so a shorter
        # *static* trip count replaces any per-element masking; the undefined
        # OOB part of the block buffer is simply never read.
        @pl.when(block_idx == num_blocks - 1)
        def _():
            accumulate(last_chunks)


@jax.jit
def depth_loss(pred, labels):
    """Scale-invariant depth loss, identical to PyTorch DepthLoss.forward."""
    assert pred.shape == labels.shape, "Shapes are inconsistent with each other"
    N, C, H, W = pred.shape
    n = H * W
    total = N * C * H * W

    p_flat = pred.reshape(-1)       # contiguous NCHW flatten: free bitcast
    l_flat = labels.reshape(-1)

    # Main slab: largest prefix made of whole (8,128) chunks.  The (<1024
    # element) remainder is handled by a tiny plain-JAX epilogue instead of
    # padding / concatenating full copies of the tensors in HBM.
    main = (total // CHUNK) * CHUNK
    sum_d = jnp.float32(0.0)
    sum_d2 = jnp.float32(0.0)

    if main > 0:
        rows = main // LANES                    # multiple of 8
        # When main == total (the common case) this slice is an identity and
        # the reshape is a free bitcast; only odd sizes pay for the prefix.
        p2d = p_flat[:main].reshape(rows, LANES)
        l2d = l_flat[:main].reshape(rows, LANES)

        tile_rows = min(TILE_ROWS_MAX, rows)    # multiple of 8
        num_blocks = pl.cdiv(rows, tile_rows)
        P = max(1, min(_num_tensorcores(), num_blocks))
        steps = pl.cdiv(num_blocks, P)
        last_chunks = (rows - (num_blocks - 1) * tile_rows) // SUBLANES

        def in_map(pi, si):
            # Clamp so over-covering grid points re-read a valid block; their
            # contribution is skipped by the scalar pl.when gate in-kernel.
            return (jnp.minimum(pi * steps + si, num_blocks - 1), 0)

        kernel = functools.partial(_depth_loss_kernel, steps, num_blocks,
                                   last_chunks)
        itemsize = pred.dtype.itemsize
        block_bytes = tile_rows * LANES * itemsize
        # 2 inputs x 2 pipeline buffers x block + slack; bounded so it is safe
        # on v5e/v6e (128 MiB physical) and v7x (64 MiB physical per TC).
        vmem_limit = int(min(max(4 * block_bytes + (8 << 20), 32 << 20),
                             48 << 20))

        sums, sumsqs = pl.pallas_call(
            kernel,
            out_shape=(
                jax.ShapeDtypeStruct((P * SUBLANES, LANES), jnp.float32),
                jax.ShapeDtypeStruct((P * SUBLANES, LANES), jnp.float32),
            ),
            grid_spec=pltpu.PrefetchScalarGridSpec(
                num_scalar_prefetch=0,
                grid=(P, steps),
                in_specs=[
                    pl.BlockSpec((tile_rows, LANES), in_map),
                    pl.BlockSpec((tile_rows, LANES), in_map),
                ],
                out_specs=(
                    pl.BlockSpec((SUBLANES, LANES), lambda pi, si: (pi, 0)),
                    pl.BlockSpec((SUBLANES, LANES), lambda pi, si: (pi, 0)),
                ),
            ),
            compiler_params=pltpu.CompilerParams(
                dimension_semantics=("parallel", "arbitrary"),
                vmem_limit_bytes=vmem_limit,
            ),
            cost_estimate=pl.CostEstimate(
                flops=4 * main,
                transcendentals=2 * main,
                bytes_accessed=2 * main * itemsize
                + 2 * 2 * P * SUBLANES * LANES * 4,
            ),
        )(p2d, l2d)

        sum_d = sum_d + jnp.sum(sums)
        sum_d2 = sum_d2 + jnp.sum(sumsqs)

    if main < total:
        # Tiny (<1024 element) ragged tail in plain JAX.
        p_tail = p_flat[main:].astype(jnp.float32)
        l_tail = l_flat[main:].astype(jnp.float32)
        d_tail = jnp.log(p_tail) - jnp.log(l_tail)
        sum_d = sum_d + jnp.sum(d_tail)
        sum_d2 = sum_d2 + jnp.sum(d_tail * d_tail)

    n_f = jnp.float32(n)
    return (sum_d2 / n_f - (sum_d * sum_d) / (n_f * n_f)) / jnp.float32(N)


def _reference(pred, labels):
    N, C, H, W = pred.shape
    n = H * W
    d = jnp.log(pred) - jnp.log(labels)
    return (jnp.sum(d ** 2) / n - (jnp.sum(d) ** 2) / n ** 2) / N


if __name__ == "__main__":
    key = jax.random.PRNGKey(0)
    k1, k2 = jax.random.split(key)
    N, C, H, W = 2, 4, 16, 16
    # Strictly positive inputs (log is taken), as depth predictions/labels.
    pred = jax.random.uniform(k1, (N, C, H, W), jnp.float32, 0.1, 5.0)
    labels = jax.random.uniform(k2, (N, C, H, W), jnp.float32, 0.1, 5.0)

    out = depth_loss(pred, labels)
    jax.block_until_ready(out)

    ref = _reference(pred, labels)
    assert jnp.allclose(out, ref, rtol=1e-5, atol=1e-5), (out, ref)

    print("KERNEL_OK")
</pallas_src>

<mosaic_0001>
module attributes {stable_mosaic.version = 11 : i64} {
  func.func @_depth_loss_kernel(%arg0: i32, %arg1: i32, %arg2: memref<16x128xf32, #tpu.memory_space<vmem>>, %arg3: memref<16x128xf32, #tpu.memory_space<vmem>>, %arg4: memref<8x128xf32, #tpu.memory_space<vmem>>, %arg5: memref<8x128xf32, #tpu.memory_space<vmem>>) attributes {dimension_semantics = [#tpu.dimension_semantics<parallel>, #tpu.dimension_semantics<arbitrary>], iteration_bounds = array<i64: 1, 1>, scalar_prefetch = 0 : i64, scratch_operands = 0 : i64, tpu.core_type = #tpu.core_type<tc>, window_params = [{transform_indices = @transform_0, window_bounds = array<i64: 16, 128>}, {transform_indices = @transform_1, window_bounds = array<i64: 16, 128>}, {transform_indices = @transform_2, window_bounds = array<i64: 8, 128>}, {transform_indices = @transform_3, window_bounds = array<i64: 8, 128>}]} {
    %c0_i32 = arith.constant 0 : i32
    %0 = arith.cmpi eq, %arg1, %c0_i32 : i32
    %1 = arith.extui %0 : i1 to i32
    %c0_i32_0 = arith.constant 0 : i32
    %2 = arith.cmpi ne, %1, %c0_i32_0 : i32
    scf.if %2 {
      %cst = arith.constant 0.000000e+00 : f32
      %8 = vector.broadcast %cst : f32 to vector<8x128xf32>
      %c0 = arith.constant 0 : index
      %c0_3 = arith.constant 0 : index
      %9 = vector.load %arg4[%c0, %c0_3] : memref<8x128xf32, #tpu.memory_space<vmem>>, vector<8x128xf32>
      tpu.vector_store %arg4[%c0, %c0_3], %8 {strides = array<i32>} : memref<8x128xf32, #tpu.memory_space<vmem>>, vector<8x128xf32>,
      %cst_4 = arith.constant 0.000000e+00 : f32
      %10 = vector.broadcast %cst_4 : f32 to vector<8x128xf32>
      %c0_5 = arith.constant 0 : index
      %c0_6 = arith.constant 0 : index
      %11 = vector.load %arg5[%c0_5, %c0_6] : memref<8x128xf32, #tpu.memory_space<vmem>>, vector<8x128xf32>
      tpu.vector_store %arg5[%c0_5, %c0_6], %10 {strides = array<i32>} : memref<8x128xf32, #tpu.memory_space<vmem>>, vector<8x128xf32>,
    } else {
    }
    %c1_i32 = arith.constant 1 : i32
    %3 = arith.muli %arg0, %c1_i32 : i32
    %4 = arith.addi %3, %arg1 : i32
    %c1_i32_1 = arith.constant 1 : i32
    %5 = arith.cmpi slt, %4, %c1_i32_1 : i32
    %6 = arith.extui %5 : i1 to i32
    %c0_i32_2 = arith.constant 0 : i32
    %7 = arith.cmpi ne, %6, %c0_i32_2 : i32
    scf.if %7 {
      %cst = arith.constant 0.000000e+00 : f32
      %8 = vector.broadcast %cst : f32 to vector<8x128xf32>
      %c0_i32_3 = arith.constant 0 : i32
      %c8_i32 = arith.constant 8 : i32
      %9 = arith.muli %c0_i32_3, %c8_i32 : i32
      %10 = tpu.assume_multiple %9, 8 : i32
      %11 = arith.index_cast %10 : i32 to index
      %c0 = arith.constant 0 : index
      %12 = vector.load %arg2[%11, %c0] : memref<16x128xf32, #tpu.memory_space<vmem>>, vector<8x128xf32>
      %13 = arith.index_cast %10 : i32 to index
      %c0_4 = arith.constant 0 : index
      %14 = vector.load %arg3[%13, %c0_4] : memref<16x128xf32, #tpu.memory_space<vmem>>, vector<8x128xf32>
      %15 = math.log %12 : vector<8x128xf32>
      %16 = math.log %14 : vector<8x128xf32>
      %17 = arith.subf %15, %16 : vector<8x128xf32>
      %18 = arith.addf %8, %17 : vector<8x128xf32>
      %19 = arith.mulf %17, %17 : vector<8x128xf32>
      %20 = arith.addf %8, %19 : vector<8x128xf32>
      %c1_i32_5 = arith.constant 1 : i32
      %c8_i32_6 = arith.constant 8 : i32
      %21 = arith.muli %c1_i32_5, %c8_i32_6 : i32
      %22 = tpu.assume_multiple %21, 8 : i32
      %23 = arith.index_cast %22 : i32 to index
      %c0_7 = arith.constant 0 : index
      %24 = vector.load %arg2[%23, %c0_7] : memref<16x128xf32, #tpu.memory_space<vmem>>, vector<8x128xf32>
      %25 = arith.index_cast %22 : i32 to index
      %c0_8 = arith.constant 0 : index
      %26 = vector.load %arg3[%25, %c0_8] : memref<16x128xf32, #tpu.memory_space<vmem>>, vector<8x128xf32>
      %27 = math.log %24 : vector<8x128xf32>
      %28 = math.log %26 : vector<8x128xf32>
      %29 = arith.subf %27, %28 : vector<8x128xf32>
      %30 = arith.addf %18, %29 : vector<8x128xf32>
      %31 = arith.mulf %29, %29 : vector<8x128xf32>
      %32 = arith.addf %20, %31 : vector<8x128xf32>
      %c2_i32 = arith.constant 2 : i32
      %c0_9 = arith.constant 0 : index
      %c0_10 = arith.constant 0 : index
      %33 = vector.load %arg4[%c0_9, %c0_10] : memref<8x128xf32, #tpu.memory_space<vmem>>, vector<8x128xf32>
      %34 = arith.addf %33, %30 : vector<8x128xf32>
      %c0_11 = arith.constant 0 : index
      %c0_12 = arith.constant 0 : index
      %35 = vector.load %arg4[%c0_11, %c0_12] : memref<8x128xf32, #tpu.memory_space<vmem>>, vector<8x128xf32>
      tpu.vector_store %arg4[%c0_11, %c0_12], %34 {strides = array<i32>} : memref<8x128xf32, #tpu.memory_space<vmem>>, vector<8x128xf32>,
      %c0_13 = arith.constant 0 : index
      %c0_14 = arith.constant 0 : index
      %36 = vector.load %arg5[%c0_13, %c0_14] : memref<8x128xf32, #tpu.memory_space<vmem>>, vector<8x128xf32>
      %37 = arith.addf %36, %32 : vector<8x128xf32>
      %c0_15 = arith.constant 0 : index
      %c0_16 = arith.constant 0 : index
      %38 = vector.load %arg5[%c0_15, %c0_16] : memref<8x128xf32, #tpu.memory_space<vmem>>, vector<8x128xf32>
      tpu.vector_store %arg5[%c0_15, %c0_16], %37 {strides = array<i32>} : memref<8x128xf32, #tpu.memory_space<vmem>>, vector<8x128xf32>,
    } else {
    }
    return
  }
  func.func @transform_0(%arg0: i32, %arg1: i32) -> (i32, i32) {
    %c1_i32 = arith.constant 1 : i32
    %0 = arith.muli %arg0, %c1_i32 : i32
    %1 = arith.addi %0, %arg1 : i32
    %c0_i32 = arith.constant 0 : i32
    %2 = arith.minsi %1, %c0_i32 : i32
    %c0_i32_0 = arith.constant 0 : i32
    %c0_i32_1 = arith.constant 0 : i32
    return %2, %c0_i32_0 : i32, i32
  }
  func.func @transform_1(%arg0: i32, %arg1: i32) -> (i32, i32) {
    %c1_i32 = arith.constant 1 : i32
    %0 = arith.muli %arg0, %c1_i32 : i32
    %1 = arith.addi %0, %arg1 : i32
    %c0_i32 = arith.constant 0 : i32
    %2 = arith.minsi %1, %c0_i32 : i32
    %c0_i32_0 = arith.constant 0 : i32
    %c0_i32_1 = arith.constant 0 : i32
    return %2, %c0_i32_0 : i32, i32
  }
  func.func @transform_2(%arg0: i32, %arg1: i32) -> (i32, i32) {
    %c0_i32 = arith.constant 0 : i32
    %c0_i32_0 = arith.constant 0 : i32
    return %arg0, %c0_i32 : i32, i32
  }
  func.func @transform_3(%arg0: i32, %arg1: i32) -> (i32, i32) {
    %c0_i32 = arith.constant 0 : i32
    %c0_i32_0 = arith.constant 0 : i32
    return %arg0, %c0_i32 : i32, i32
  }
}

</mosaic_0001>

<llo_original>
// kernel: depth_loss.1
$region0: #{depth_loss.1}
  #allocation0 [shape = 'u32[]', space=smem, size = 0x4, offset = 0x4, fixed_abs, tag = 'smem constant byte address 0x4 - core index']
  #allocation1 [shape = 'u32[144,128]{1,0:T(1,128)}', space=vmem, size = 0x12000, scoped, tag = 'internal scratch']
  %s0 = inlined_call_operand.vmem [shape: f32[16,128], index: 0, kind: input, shape index: {}]
  %s1 = inlined_call_operand.vmem [shape: f32[16,128], index: 1, kind: input, shape index: {}]
  %s2 = inlined_call_operand.vmem [shape: f32[8,128], index: 2, kind: output, shape index: {0}]
  %s3 = inlined_call_operand.vmem [shape: f32[8,128], index: 3, kind: output, shape index: {1}]
  %4 = xla_tuple %s2, %s3
  %s5 = sld [smem:[#allocation0]]
  $region34: #{depth_loss.1} parent=0
    _
  %s7 = ssub.s32 1, %s5
  %s8 = scalar_select 0, %s7, %s5
  // Predicated region
  $region2: #{depth_loss.1} parent=0 // pred_check
    _
  $region3: #{depth_loss.1} parent=0 // pred_check_branch
    %10 = sbr.rel (0) target = $region5
  $region4: #{depth_loss.1} parent=0 // pred_region
    %s11 = sadd.s32 0, 0
    %p12 = scmp.lt.s32.totalorder %s11, 0
    %s13 = scalar_select %p12, %s11, 0
    %s14 = smul.u32 2, %s13
    %p15 = scmp.lt.s32.totalorder %s14, 1
    %s16 = scalar_select %p15, %s14, 1
    %s17 = smul.addr %s16, 8
    %s18 = scalar_lea.vmem %s0, %s17
    %s19 = sadd.s32 0, 0
    %p20 = scmp.lt.s32.totalorder %s19, 0
    %s21 = scalar_select %p20, %s19, 0
    %s22 = smul.u32 2, %s21
  $region5: #{depth_loss.1} parent=0 // pred_fallthru
    _
  // Predicated region
  $region6: #{depth_loss.1} parent=0 // pred_check
    _
  $region7: #{depth_loss.1} parent=0 // pred_check_branch
    %24 = sbr.rel (0) target = $region9
  $region8: #{depth_loss.1} parent=0 // pred_region
    %s25 = sadd.s32 0, 0
    %p26 = scmp.lt.s32.totalorder %s25, 0
    %s27 = scalar_select %p26, %s25, 0
    %s28 = smul.u32 2, %s27
    %p29 = scmp.lt.s32.totalorder %s28, 1
    %s30 = scalar_select %p29, %s28, 1
    %s31 = smul.addr %s30, 8
    %s32 = scalar_lea.vmem %s1, %s31
    %s33 = sadd.s32 0, 0
    %p34 = scmp.lt.s32.totalorder %s33, 0
    %s35 = scalar_select %p34, %s33, 0
    %s36 = smul.u32 2, %s35
  $region9: #{depth_loss.1} parent=0 // pred_fallthru
    _
  %s37 = sadd.s32 0, 0
  %p38 = scmp.lt.s32.totalorder %s37, 0
  %s39 = scalar_select %p38, %s37, 0
  %s40 = smul.u32 2, %s39
  %p41 = scmp.lt.s32.totalorder %s40, 1
  %s42 = scalar_select %p41, %s40, 1
  %s43 = smul.addr %s42, 8
  %s44 = scalar_lea.vmem %s0, %s43
  %s45 = sadd.s32 0, 0
  %p46 = scmp.lt.s32.totalorder %s45, 0
  %s47 = scalar_select %p46, %s45, 0
  %s48 = smul.u32 2, %s47
  %p49 = scmp.lt.s32.totalorder %s48, 1
  %s50 = scalar_select %p49, %s48, 1
  %s51 = smul.addr %s50, 8
  %s52 = scalar_lea.vmem %s1, %s51
  %s53 = sadd.s32 0, 0
  %p54 = scmp.lt.s32.totalorder %s53, 0
  %s55 = scalar_select %p54, %s53, 0
  %s56 = smul.u32 2, %s55
  %p57 = scmp.lt.s32.totalorder %s56, 1
  %s58 = scalar_select %p57, %s56, 1
  %s59 = smul.addr %s58, 8
  %s60 = scalar_lea.vmem %s0, %s59
  %s61 = sadd.s32 0, 0
  %p62 = scmp.lt.s32.totalorder %s61, 0
  %s63 = scalar_select %p62, %s61, 0
  %s64 = smul.u32 2, %s63
  %s65 = sadd.s32 0, 0
  %p66 = scmp.lt.s32.totalorder %s65, 0
  %s67 = scalar_select %p66, %s65, 0
  %s68 = smul.u32 2, %s67
  %p69 = scmp.lt.s32.totalorder %s68, 1
  %s70 = scalar_select %p69, %s68, 1
  %s71 = smul.addr %s70, 8
  %s72 = scalar_lea.vmem %s1, %s71
  %s73 = sadd.s32 0, 0
  %p74 = scmp.lt.s32.totalorder %s73, 0
  %s75 = scalar_select %p74, %s73, 0
  %s76 = smul.u32 2, %s75
  %p77 = scmp.eq.s32.totalorder 0, 0
  // Predicated region
  $region10: #{depth_loss.1} parent=0 // pred_check
    %p78 = pneg %p77
  $region11: #{depth_loss.1} parent=0 // pred_check_branch
    %80 = sbr.rel (%p78) target = $region13
  $region12: #{depth_loss.1} parent=0 // pred_region
    %81 = vst [vmem:[%s2] sm:$0xff] 0.0
    %82 = vst [vmem:[%s3] sm:$0xff] 0.0
  $region13: #{depth_loss.1} parent=0 // pred_fallthru
    _
  %s83 = sadd.s32 0, 0
  %p84 = scmp.lt.s32.totalorder %s83, 1
  // Predicated region
  $region14: #{depth_loss.1} parent=0 // pred_check
    %p85 = pneg %p84
  $region15: #{depth_loss.1} parent=0 // pred_check_branch
    %87 = sbr.rel (%p85) target = $region17
  $region16: #{depth_loss.1} parent=0 // pred_region
    %v88 = vld [vmem:[%s60] sm:$0xff]
    %v89 = vld [vmem:[%s72] sm:$0xff]
    %v90 = vlog2.pop %v88
    %v91 = vmul.f32 %v90, 0.6931472
    %v92 = vlog2.pop %v89
    %v93 = vmul.f32 %v92, 0.6931472
    %v94 = vsub.f32 %v91, %v93
    %v95 = vadd.f32 %v94, 0.0
    %v96 = vmul.f32 %v94, %v94
    %v97 = vadd.f32 %v96, 0.0
    %s98 = scalar_lea.vmem %s60, 8
    %v99 = vld [vmem:[%s98] sm:$0xff]
    %s100 = scalar_lea.vmem %s72, 8
    %v101 = vld [vmem:[%s100] sm:$0xff]
    %v102 = vlog2.pop %v99
    %v103 = vmul.f32 %v102, 0.6931472
    %v104 = vlog2.pop %v101
    %v105 = vmul.f32 %v104, 0.6931472
    %v106 = vsub.f32 %v103, %v105
    %v107 = vadd.f32 %v95, %v106
    %v108 = vmul.f32 %v106, %v106
    %v109 = vadd.f32 %v97, %v108
    %v110 = vld [vmem:[%s2] sm:$0xff]
    %v111 = vadd.f32 %v110, %v107
    %112 = vst [vmem:[%s2] sm:$0xff] %v111
    %v113 = vld [vmem:[%s3] sm:$0xff]
    %v114 = vadd.f32 %v113, %v109
    %115 = vst [vmem:[%s3] sm:$0xff] %v114
  $region17: #{depth_loss.1} parent=0 // pred_fallthru
    _
  // Predicated region
  $region18: #{depth_loss.1} parent=0 // pred_check
    _
  $region19: #{depth_loss.1} parent=0 // pred_check_branch
    %117 = sbr.rel (0) target = $region21
  $region20: #{depth_loss.1} parent=0 // pred_region
    _
  $region21: #{depth_loss.1} parent=0 // pred_fallthru
    _
  // Predicated region
  $region22: #{depth_loss.1} parent=0 // pred_check
    _
  $region23: #{depth_loss.1} parent=0 // pred_check_branch
    %119 = sbr.rel (0) target = $region25
  $region24: #{depth_loss.1} parent=0 // pred_region
    _
  $region25: #{depth_loss.1} parent=0 // pred_fallthru
    _
  // Predicated region
  $region26: #{depth_loss.1} parent=0 // pred_check
    _
  $region27: #{depth_loss.1} parent=0 // pred_check_branch
    %121 = sbr.rel (0) target = $region29
  $region28: #{depth_loss.1} parent=0 // pred_region
    _
  $region29: #{depth_loss.1} parent=0 // pred_fallthru
    _
  // Predicated region
  $region30: #{depth_loss.1} parent=0 // pred_check
    _
  $region31: #{depth_loss.1} parent=0 // pred_check_branch
    %123 = sbr.rel (0) target = $region33
  $region32: #{depth_loss.1} parent=0 // pred_region
    _
  $region33: #{depth_loss.1} parent=0 // pred_fallthru
    _

</llo_original>
